<compile_context>
chip_gen: v7x
topology: tpu7x:2x2x1
jax: 0.10.0
libtpu: 0.0.40
codegen_flags: <defaults>
</compile_context>

<pallas_src>
import math

import jax
import jax.numpy as jnp
from jax.experimental import pallas as pl
from jax.experimental.pallas import tpu as pltpu

_LANE = 128


def _let_kernel(x_ref, shift_ref, inv_ref, o_ref):
    # x_ref:     (tile_r, tile_c)   activation tile
    # shift_ref: (1, tile_c)        shift in compute dtype, broadcasts over rows
    # inv_ref:   (1, tile_c)        precomputed 1/(scale + eps) in compute dtype
    x = x_ref[...].astype(shift_ref.dtype)
    o_ref[...] = ((x - shift_ref[...]) * inv_ref[...]).astype(o_ref.dtype)


def _sublane_for(*dtypes):
    """Dtype-native sublane multiple: 8 for 32-bit, 16 for 16-bit, 32 for 8-bit."""
    s = 8
    for dt in dtypes:
        itemsize = max(1, jnp.dtype(dt).itemsize)
        s = max(s, 8 * (4 // min(4, itemsize)))
    return s


def _vmem_capacity_bytes():
    try:
        info = pltpu.get_tpu_info()
        cap = getattr(info, "vmem_capacity_bytes", None)
        if cap:
            return int(cap)
    except Exception:
        pass
    return 64 * 1024 * 1024  # conservative (v7x-sized) fallback


def _choose_tiles(rows, cols, bytes_per_elem, sublane, target_bytes):
    """Pick (tile_r, tile_c).

    `cols` is guaranteed by the wrapper to be a multiple of 128.
    `bytes_per_elem` counts input + output bytes, so `target_bytes` bounds the
    combined per-step activation + result tile (before 2x double buffering).
    """
    # Channel tile: full width unless even a single sublane slab blows the
    # budget; then split on a 128-lane boundary (always legal: cols % 128 == 0).
    if cols * bytes_per_elem * sublane > target_bytes:
        tile_c = (target_bytes // (sublane * bytes_per_elem)) // _LANE * _LANE
        tile_c = max(_LANE, min(tile_c, cols))
    else:
        tile_c = cols

    # Row tile: as many rows as the budget allows, rounded to the sublane
    # multiple; ragged last block is clipped by Pallas.
    if rows <= sublane:
        return rows, tile_c  # equals full dim -> allowed

    budget_rows = max(sublane,
                      (target_bytes // (tile_c * bytes_per_elem)) // sublane * sublane)
    max_rows = (rows // sublane) * sublane
    tile_r = min(budget_rows, max_rows)

    # Megacore (v7x has 2 TensorCores): guarantee >= 2 row blocks when possible.
    if tile_r >= rows and rows >= 2 * sublane:
        half = -(-rows // 2)                      # ceil(rows / 2)
        tile_r = -(-half // sublane) * sublane    # round up to sublane multiple
        if tile_r >= rows:                        # defensive: force a split
            tile_r = max(sublane, tile_r - sublane)
    return tile_r, tile_c


def learnable_equivalent_transformation(activation, scale_factor, shift_factor,
                                        *, eps=1e-6,
                                        target_block_bytes=None,
                                        vmem_limit_bytes=None):
    """activation: [..., C]; scale_factor / shift_factor: [C]."""
    orig_shape = activation.shape
    C = orig_shape[-1]

    # Match PyTorch type promotion (f32 params + bf16/f16 activation -> f32).
    out_dtype = jnp.result_type(activation.dtype, scale_factor.dtype,
                                shift_factor.dtype)
    compute_dtype = out_dtype if jnp.issubdtype(out_dtype, jnp.floating) \
        else jnp.float32

    x2d = activation.reshape(-1, C)
    R_orig = x2d.shape[0]
    R = R_orig

    # Precompute the reciprocal once on the tiny [C] vector (f32 for accuracy).
    shift_v = shift_factor.astype(jnp.float32)
    inv_v = 1.0 / (scale_factor.astype(jnp.float32) + jnp.float32(eps))

    # Lane-densify when C is not a multiple of 128: fold k consecutive rows
    # into the lane axis so every vreg / store is fully populated.  Pad rows
    # (cheap, zeros) so the fold always applies — no masked-store fallback.
    folded = C % _LANE != 0
    if folded:
        k = math.lcm(C, _LANE) // C
        if R % k != 0:
            pad = k - (R % k)
            x2d = jnp.pad(x2d, ((0, pad), (0, 0)))
            R = R + pad
        x2d = x2d.reshape(R // k, k * C)
        shift_v = jnp.tile(shift_v, k)
        inv_v = jnp.tile(inv_v, k)

    Rw, Cw = x2d.shape
    shift2d = shift_v.reshape(1, Cw).astype(compute_dtype)
    inv2d = inv_v.reshape(1, Cw).astype(compute_dtype)

    in_bytes = jnp.dtype(x2d.dtype).itemsize
    out_bytes = jnp.dtype(out_dtype).itemsize
    sublane = _sublane_for(x2d.dtype, out_dtype)

    # Generation-aware budgets (fall back to v7x-safe values if query fails).
    if target_block_bytes is None or vmem_limit_bytes is None:
        vmem_cap = _vmem_capacity_bytes()
        if target_block_bytes is None:
            target_block_bytes = (16 * 1024 * 1024
                                  if vmem_cap >= 128 * 1024 * 1024
                                  else 8 * 1024 * 1024)
        if vmem_limit_bytes is None:
            vmem_limit_bytes = int(min(3 * vmem_cap // 4, 64 * 1024 * 1024))

    tile_r, tile_c = _choose_tiles(Rw, Cw, in_bytes + out_bytes, sublane,
                                   target_block_bytes)

    # Rows are the innermost (fastest-varying) grid axis so the small
    # (1, tile_c) param tiles stay resident across the row sweep.
    grid = (pl.cdiv(Cw, tile_c), pl.cdiv(Rw, tile_r))

    out = pl.pallas_call(
        _let_kernel,
        out_shape=jax.ShapeDtypeStruct((Rw, Cw), out_dtype),
        grid=grid,
        in_specs=[
            pl.BlockSpec((tile_r, tile_c), lambda j, i: (i, j)),
            pl.BlockSpec((1, tile_c), lambda j, i: (0, j)),
            pl.BlockSpec((1, tile_c), lambda j, i: (0, j)),
        ],
        out_specs=pl.BlockSpec((tile_r, tile_c), lambda j, i: (i, j)),
        compiler_params=pltpu.CompilerParams(
            dimension_semantics=("parallel", "parallel"),
            vmem_limit_bytes=int(vmem_limit_bytes)),
    )(x2d, shift2d, inv2d)

    if folded:
        out = out.reshape(R, C)
        if R != R_orig:
            out = out[:R_orig]
    return out.reshape(orig_shape)


if __name__ == "__main__":
    key = jax.random.PRNGKey(0)
    k0, k1 = jax.random.split(key)

    # --- Primary case: matches the module init (scale=0.1*ones, shift=zeros) ---
    batch, seq, num_channels = 2, 8, 32
    scale_factor = jnp.ones((num_channels,), jnp.float32) * 0.1
    shift_factor = jnp.zeros((num_channels,), jnp.float32)
    activation = jax.random.normal(k0, (batch, seq, num_channels), jnp.float32)

    out = learnable_equivalent_transformation(activation, scale_factor, shift_factor)
    out = jax.block_until_ready(out)

    ref = (activation - shift_factor) / (scale_factor + 1e-6)
    assert out.shape == activation.shape
    assert out.dtype == ref.dtype
    # Reciprocal-multiply vs true divide: 1-2 ulp difference.
    assert jnp.allclose(out, ref, rtol=1e-5, atol=1e-6)

    # --- Second case: exercises the row-pad + lane-fold path (R % k != 0) ---
    b2, s2, c2 = 3, 5, 48  # C=48 -> fold factor k=8; R=15 -> padded to 16
    scale2 = jax.random.uniform(k1, (c2,), jnp.float32, 0.05, 0.5)
    shift2 = jax.random.normal(k1, (c2,), jnp.float32) * 0.01
    act2 = jax.random.normal(k0, (b2, s2, c2), jnp.float32)

    out2 = jax.block_until_ready(
        learnable_equivalent_transformation(act2, scale2, shift2))
    ref2 = (act2 - shift2) / (scale2 + 1e-6)
    assert out2.shape == act2.shape
    assert jnp.allclose(out2, ref2, rtol=1e-5, atol=1e-6)

    print("KERNEL_OK")
</pallas_src>

<mosaic_0001>
module attributes {stable_mosaic.version = 11 : i64} {
  func.func @_let_kernel(%arg0: i32, %arg1: i32, %arg2: memref<4x128xf32, #tpu.memory_space<vmem>>, %arg3: memref<1x128xf32, #tpu.memory_space<vmem>>, %arg4: memref<1x128xf32, #tpu.memory_space<vmem>>, %arg5: memref<4x128xf32, #tpu.memory_space<vmem>>) attributes {dimension_semantics = [#tpu.dimension_semantics<parallel>, #tpu.dimension_semantics<parallel>], iteration_bounds = array<i64: 1, 1>, scalar_prefetch = 0 : i64, scratch_operands = 0 : i64, tpu.core_type = #tpu.core_type<tc>, window_params = [{transform_indices = @transform_0, window_bounds = array<i64: 4, 128>}, {transform_indices = @transform_1, window_bounds = array<i64: 1, 128>}, {transform_indices = @transform_2, window_bounds = array<i64: 1, 128>}, {transform_indices = @transform_3, window_bounds = array<i64: 4, 128>}]} {
    %c0 = arith.constant 0 : index
    %c0_0 = arith.constant 0 : index
    %0 = vector.load %arg2[%c0, %c0_0] : memref<4x128xf32, #tpu.memory_space<vmem>>, vector<4x128xf32>
    %c0_1 = arith.constant 0 : index
    %c0_2 = arith.constant 0 : index
    %1 = vector.load %arg3[%c0_1, %c0_2] : memref<1x128xf32, #tpu.memory_space<vmem>>, vector<1x128xf32>
    %2 = vector.broadcast %1 : vector<1x128xf32> to vector<4x128xf32>
    %3 = arith.subf %0, %2 : vector<4x128xf32>
    %c0_3 = arith.constant 0 : index
    %c0_4 = arith.constant 0 : index
    %4 = vector.load %arg4[%c0_3, %c0_4] : memref<1x128xf32, #tpu.memory_space<vmem>>, vector<1x128xf32>
    %5 = vector.broadcast %4 : vector<1x128xf32> to vector<4x128xf32>
    %6 = arith.mulf %3, %5 : vector<4x128xf32>
    %c0_5 = arith.constant 0 : index
    %c0_6 = arith.constant 0 : index
    %7 = vector.load %arg5[%c0_5, %c0_6] : memref<4x128xf32, #tpu.memory_space<vmem>>, vector<4x128xf32>
    tpu.vector_store %arg5[%c0_5, %c0_6], %6 {strides = array<i32>} : memref<4x128xf32, #tpu.memory_space<vmem>>, vector<4x128xf32>,
    return
  }
  func.func @transform_0(%arg0: i32, %arg1: i32) -> (i32, i32) {
    %c0_i32 = arith.constant 0 : i32
    return %arg1, %arg0 : i32, i32
  }
  func.func @transform_1(%arg0: i32, %arg1: i32) -> (i32, i32) {
    %c0_i32 = arith.constant 0 : i32
    %c0_i32_0 = arith.constant 0 : i32
    return %c0_i32, %arg0 : i32, i32
  }
  func.func @transform_2(%arg0: i32, %arg1: i32) -> (i32, i32) {
    %c0_i32 = arith.constant 0 : i32
    %c0_i32_0 = arith.constant 0 : i32
    return %c0_i32, %arg0 : i32, i32
  }
  func.func @transform_3(%arg0: i32, %arg1: i32) -> (i32, i32) {
    %c0_i32 = arith.constant 0 : i32
    return %arg1, %arg0 : i32, i32
  }
}

</mosaic_0001>

<llo_original>
// kernel: tpu_custom_call.1
$region0: #{tpu_custom_call.1}
  #allocation0 [shape = 'u32[]', space=smem, size = 0x4, offset = 0x4, fixed_abs, tag = 'smem constant byte address 0x4 - core index']
  #allocation1 [shape = 'u32[144,128]{1,0:T(1,128)}', space=vmem, size = 0x12000, scoped, tag = 'internal scratch']
  %s0 = inlined_call_operand.hbm [shape: f32[4,128], index: 0, kind: input, shape index: {}]
  %s1 = inlined_call_operand.vmem [shape: f32[1,128], index: 1, kind: input, shape index: {}]
  %s2 = inlined_call_operand.vmem [shape: f32[1,128], index: 2, kind: input, shape index: {}]
  %s3 = inlined_call_operand.hbm [shape: f32[4,128], index: 3, kind: output, shape index: {}]
  %s4 = sld [smem:[#allocation0]]
  $region26: #{tpu_custom_call.1} parent=0
    _
  %s6 = ssub.s32 1, %s4
  %s7 = scalar_select 0, %s6, %s4
  $region1: #{tpu_custom_call.1} parent=0
    #allocation2 [shape = 'u8[2048]{0}', space=vmem, size = 0x800, scoped, tag = 'input window, operand 0, single buffered']
    #allocation3 [shape = 's32[1]{0}', space=sflag, size = 0x4, scoped, tag = 'scoped memory for tpu_custom_call.1']
    #allocation4 [shape = 's32[1]{0}', space=sflag, size = 0x4, scoped, tag = 'scoped memory for tpu_custom_call.1']
    #allocation5 [shape = 'u8[2048]{0}', space=vmem, size = 0x800, scoped, tag = 'output window, operand 0, single buffered']
    %8 = vsyncpa [#allocation3], 0
    %9 = vsyncpa [#allocation4], 0
    // Predicated region
    $region2: #{tpu_custom_call.1} parent=1 // pred_check
      _
    $region3: #{tpu_custom_call.1} parent=1 // pred_check_branch
      %11 = sbr.rel (0) target = $region5
    $region4: #{tpu_custom_call.1} parent=1 // pred_region
      %s13 = ssub.s32 64, 64
      %14 = vsyncadd [#allocation3], %s13
      %s16 = sshll.u32 [#allocation2], 4
      %s17 = int_to_ptr.vmem [resolvable:$true] %s16
      %19 = dma.hbm_to_vmem [thread:$0]  %s0, 64, %s17, [#allocation3]
    $region5: #{tpu_custom_call.1} parent=1 // pred_fallthru
      _
    // Predicated region
    $region6: #{tpu_custom_call.1} parent=1 // pred_check
      _
    $region7: #{tpu_custom_call.1} parent=1 // pred_check_branch
      %21 = sbr.rel (0) target = $region9
    $region8: #{tpu_custom_call.1} parent=1 // pred_region
      _
    $region9: #{tpu_custom_call.1} parent=1 // pred_fallthru
      _
    // Predicated region
    $region10: #{tpu_custom_call.1} parent=1 // pred_check
      _
    $region11: #{tpu_custom_call.1} parent=1 // pred_check_branch
      %23 = sbr.rel (0) target = $region13
    $region12: #{tpu_custom_call.1} parent=1 // pred_region
      _
    $region13: #{tpu_custom_call.1} parent=1 // pred_fallthru
      _
    // Predicated region
    $region14: #{tpu_custom_call.1} parent=1 // pred_check
      _
    $region15: #{tpu_custom_call.1} parent=1 // pred_check_branch
      %25 = sbr.rel (0) target = $region17
    $region16: #{tpu_custom_call.1} parent=1 // pred_region
      %26 = dma.done [#allocation3], 64
    $region17: #{tpu_custom_call.1} parent=1 // pred_fallthru
      _
    %v27 = vld [vmem:[#allocation2] sm:$0xf]
    %v28 = vld [vmem:[%s1] sm:$0x1]
    %v30 = vlaneseq
    %v31 = vshrl.u32 %v30, 7
    %v32 = vsub.s32 0, %v31
    %v33 = vrot.slane %v28, %v32
    %v35 = vsub.f32 %v27, %v33
    %v36 = vld [vmem:[%s2] sm:$0x1]
    %v38 = vlaneseq
    %v39 = vshrl.u32 %v38, 7
    %v40 = vsub.s32 0, %v39
    %v41 = vrot.slane %v36, %v40
    %v43 = vmul.f32 %v35, %v41
    %44 = vst [vmem:[#allocation5] sm:$0xf] %v43
    // Predicated region
    $region18: #{tpu_custom_call.1} parent=1 // pred_check
      _
    $region19: #{tpu_custom_call.1} parent=1 // pred_check_branch
      %46 = sbr.rel (0) target = $region21
    $region20: #{tpu_custom_call.1} parent=1 // pred_region
      %s48 = ssub.s32 64, 64
      %49 = vsyncadd [#allocation4], %s48
      %s51 = sshll.u32 [#allocation5], 4
      %s52 = int_to_ptr.vmem [resolvable:$true] %s51
      %54 = dma.vmem_to_hbm [thread:$0]  %s52, 64, %s3, [#allocation4]
    $region21: #{tpu_custom_call.1} parent=1 // pred_fallthru
      _
    // Predicated region
    $region22: #{tpu_custom_call.1} parent=1 // pred_check
      _
    $region23: #{tpu_custom_call.1} parent=1 // pred_check_branch
      %56 = sbr.rel (0) target = $region25
    $region24: #{tpu_custom_call.1} parent=1 // pred_region
      %57 = dma.done [#allocation4], 64
    $region25: #{tpu_custom_call.1} parent=1 // pred_fallthru
      _
    %58 = vsyncpa [#allocation3], 1
    %59 = vsyncpa [#allocation4], 1

</llo_original>
